<compile_context>
chip_gen: v5e
topology: v5e:2x2
jax: 0.10.0
libtpu: 0.0.40
codegen_flags: <defaults>
</compile_context>

<pallas_src>
import functools

import jax
import jax.numpy as jnp
from jax import lax
from jax.experimental import pallas as pl
from jax.experimental.pallas import tpu as pltpu

KH, KW, STRIDE, PAD = 4, 4, 2, 1
BN_EPS = 1e-5
LRELU_SLOPE = 0.2
LANE = 128


def _round_up(x, m):
    return (x + m - 1) // m * m


def _pick_row_tile(oh, ow, n, per_row_bytes, target_bytes=4 << 20):
    """Output-row tile for pass 1: divides oh, keeps the y block sublane-legal
    (th*ow % 8 == 0) and the per-step footprint below target_bytes."""
    divs = [d for d in range(1, oh + 1) if oh % d == 0]
    valid = [d for d in divs if (d * ow) % 8 == 0]
    if not valid:
        # Whole-image block: its row count equals the full dim only when n==1.
        if n == 1 or (oh * ow) % 8 == 0:
            return oh
        raise ValueError("ConvBlock kernel needs oh*ow % 8 == 0 when N > 1")
    fitting = [d for d in valid if d * per_row_bytes <= target_bytes]
    return max(fitting) if fitting else min(valid)


def _pick_group(num_blocks, base_rows, cap_rows):
    """How many pass-1 row blocks to fuse per pass-2 step (exact division)."""
    kmax = max(1, min(num_blocks, cap_rows // max(base_rows, 1)))
    for k in range(kmax, 0, -1):
        if num_blocks % k == 0:
            return k
    return 1


# ---------------------------------------------------------------------------
# Pass 1: LeakyReLU + conv (4 shifted MXU matmuls over the space-to-depth
# input row tile) + per-tile centred BatchNorm partial statistics.
# ---------------------------------------------------------------------------
def _conv_stats_kernel(xs_ref, halo_ref, w_ref, y_ref, stats_ref, *, th, ow):
    # xs_ref:    (1, th, ow+1, 4*Cin)   row tile of the space-to-depth input
    # halo_ref:  (1, 1,  ow+1, 4*Cin)   one extra row (2x2 window overlap)
    # w_ref:     (4, 4*Cin, Cp)         weights for the 4 (di, dj) shifts
    # y_ref:     (th*ow, Cp)            pre-BN conv rows (compute dtype)
    # stats_ref: (1, 2, Cp)             row 0: sum, row 1: centred sum of squares
    x = jnp.concatenate([xs_ref[0], halo_ref[0]], axis=0)        # (th+1, ow+1, K)
    slope = jnp.asarray(LRELU_SLOPE, dtype=x.dtype)
    x = jnp.where(x >= 0, x, x * slope)    # LeakyReLU; padding zeros stay zero

    k = x.shape[-1]
    acc = None
    for di in range(2):
        for dj in range(2):
            win = x[di:di + th, dj:dj + ow, :].reshape(th * ow, k)
            part = jnp.dot(win, w_ref[2 * di + dj],
                           preferred_element_type=jnp.float32)
            acc = part if acc is None else acc + part

    y_ref[...] = acc.astype(y_ref.dtype)

    # Centred per-tile stats; combined with the pooled-variance formula in the
    # wrapper, so no E[x^2] - mean^2 cancellation.
    inv_cnt = jnp.float32(1.0 / (th * ow))
    ssum = jnp.sum(acc, axis=0, keepdims=True)                    # (1, Cp)
    cen = acc - ssum * inv_cnt
    m2 = jnp.sum(cen * cen, axis=0, keepdims=True)                # (1, Cp)
    stats_ref[...] = jnp.concatenate([ssum, m2], axis=0)[None]


# ---------------------------------------------------------------------------
# Pass 2: y * scale + shift (BatchNorm normalize + affine), lane-dense tiles.
# ---------------------------------------------------------------------------
def _bn_apply_kernel(y_ref, scale_ref, shift_ref, out_ref):
    y = y_ref[...].astype(jnp.float32)
    out_ref[...] = y * scale_ref[...] + shift_ref[...]


@functools.partial(jax.jit, static_argnames=("compute_dtype",))
def conv_block(x_nchw, weight_oihw, bias, gamma, beta,
               compute_dtype=jnp.bfloat16):
    """Forward of ConvBlock(activation=True, batch_norm=True).

    x_nchw:      (N, Cin, H, W) float32
    weight_oihw: (Cout, Cin, 4, 4)  PyTorch Conv2d layout
    bias, gamma, beta: (Cout,)
    returns (N, Cout, H//2, W//2) float32
    """
    del bias  # per-channel conv bias cancels exactly in training-mode BN
    n, cin, h, w = x_nchw.shape
    cout = weight_oihw.shape[0]
    assert h % 2 == 0 and w % 2 == 0, "k=4,s=2,p=1 ConvBlock expects even H/W"
    oh, ow = h // 2, w // 2
    hp, wp = oh + 1, ow + 1
    k4 = 4 * cin                         # matmul K dim, left UNPADDED in HBM
    cp = _round_up(cout, LANE)           # lane-dense output channels
    cd_bytes = jnp.dtype(compute_dtype).itemsize

    # --- glue: NCHW -> NHWC, zero-pad, space-to-depth by 2 (no replication) ---
    x_nhwc = jnp.transpose(x_nchw, (0, 2, 3, 1))
    xp = jnp.pad(x_nhwc, ((0, 0), (PAD, PAD), (PAD, PAD), (0, 0)))
    xs = xp.reshape(n, hp, 2, wp, 2, cin)
    xs = jnp.transpose(xs, (0, 1, 3, 2, 4, 5)).reshape(n, hp, wp, k4)
    xs = xs.astype(compute_dtype)

    # --- glue: weights -> (4, K, Cp) with
    #     w4[2*di+dj, (2*r+c)*cin + ci, co] = weight[co, ci, 2*di+r, 2*dj+c],
    #     matching the space-to-depth channel ordering above. ---
    w_t = jnp.transpose(weight_oihw, (2, 3, 1, 0))        # (KH, KW, Cin, Cout)
    blocks = [w_t[2 * di:2 * di + 2, 2 * dj:2 * dj + 2].reshape(k4, cout)
              for di in range(2) for dj in range(2)]
    w4 = jnp.stack(blocks, axis=0)                        # (4, k4, cout)
    w4 = jnp.pad(w4, ((0, 0), (0, 0), (0, cp - cout))).astype(compute_dtype)

    # --- pass-1 tiling: bounded per-step footprint, many pipelined steps ---
    per_row_bytes = (wp * k4 + ow * cp) * cd_bytes
    th = _pick_row_tile(oh, ow, n, per_row_bytes)
    row_tiles = oh // th
    m = n * oh * ow
    n_blocks = n * row_tiles
    block_rows = th * ow

    y_flat, stats = pl.pallas_call(
        functools.partial(_conv_stats_kernel, th=th, ow=ow),
        out_shape=(
            jax.ShapeDtypeStruct((m, cp), compute_dtype),      # pre-BN conv out
            jax.ShapeDtypeStruct((n_blocks, 2, cp), jnp.float32),  # partial stats
        ),
        grid=(n, row_tiles),
        in_specs=[
            pl.BlockSpec((1, th, wp, k4), lambda b, i: (b, i, 0, 0)),
            pl.BlockSpec((1, 1, wp, k4), lambda b, i: (b, (i + 1) * th, 0, 0)),
            # Constant index map -> weights DMA'd once, reused every step.
            pl.BlockSpec((4, k4, cp), lambda b, i: (0, 0, 0)),
        ],
        out_specs=(
            pl.BlockSpec((block_rows, cp), lambda b, i: (b * row_tiles + i, 0)),
            pl.BlockSpec((1, 2, cp), lambda b, i: (b * row_tiles + i, 0, 0)),
        ),
        compiler_params=pltpu.CompilerParams(
            dimension_semantics=("parallel", "parallel"),
            # Conservative for v7x (64 MiB/TC); tiles are budgeted to a few MiB
            # each so v5e/v6e also stay well inside their scoped limits.
            vmem_limit_bytes=48 * 1024 * 1024),
    )(xs, xs, w4)

    # --- pooled-variance combine of per-tile partials (O(tiles*Cp) glue) ---
    cnt_t = jnp.float32(block_rows)
    sums = stats[:, 0, :]                                  # (n_blocks, cp)
    m2s = stats[:, 1, :]
    mean_t = sums / cnt_t
    mean = jnp.sum(sums, axis=0) / jnp.float32(m)
    var = (jnp.sum(m2s, axis=0)
           + cnt_t * jnp.sum((mean_t - mean[None, :]) ** 2, axis=0)) / jnp.float32(m)
    var = jnp.maximum(var, 0.0)

    valid = jnp.arange(cp) < cout                          # mask padded channels
    gamma_p = jnp.pad(gamma.astype(jnp.float32), (0, cp - cout))
    beta_p = jnp.pad(beta.astype(jnp.float32), (0, cp - cout))
    scale = jnp.where(valid, gamma_p * lax.rsqrt(var + BN_EPS), 0.0)
    shift = jnp.where(valid, beta_p - mean * scale, 0.0)

    # --- pass 2: lane-dense scale/shift over groups of pass-1 row blocks ---
    cap_rows = max(block_rows, (4 << 20) // (cp * (cd_bytes + 4)))
    group = _pick_group(n_blocks, block_rows, cap_rows)
    tile2 = block_rows * group
    out_flat = pl.pallas_call(
        _bn_apply_kernel,
        out_shape=jax.ShapeDtypeStruct((m, cp), jnp.float32),
        grid=(n_blocks // group,),
        in_specs=[
            pl.BlockSpec((tile2, cp), lambda i: (i, 0)),
            pl.BlockSpec((1, cp), lambda i: (0, 0)),
            pl.BlockSpec((1, cp), lambda i: (0, 0)),
        ],
        out_specs=pl.BlockSpec((tile2, cp), lambda i: (i, 0)),
        compiler_params=pltpu.CompilerParams(
            dimension_semantics=("parallel",)),
    )(y_flat, scale.reshape(1, cp), shift.reshape(1, cp))

    out_nhwc = out_flat.reshape(n, oh, ow, cp)[:, :, :, :cout]
    return jnp.transpose(out_nhwc, (0, 3, 1, 2))           # back to NCHW


def _reference(x_nchw, weight_oihw, bias, gamma, beta):
    xr = jnp.where(x_nchw >= 0, x_nchw, LRELU_SLOPE * x_nchw)
    y = lax.conv_general_dilated(
        xr, weight_oihw, window_strides=(STRIDE, STRIDE),
        padding=((PAD, PAD), (PAD, PAD)),
        dimension_numbers=("NCHW", "OIHW", "NCHW"))
    y = y + bias[None, :, None, None]
    mean = jnp.mean(y, axis=(0, 2, 3), keepdims=True)
    var = jnp.mean((y - mean) ** 2, axis=(0, 2, 3), keepdims=True)
    y_hat = (y - mean) / jnp.sqrt(var + BN_EPS)
    return y_hat * gamma[None, :, None, None] + beta[None, :, None, None]


if __name__ == "__main__":
    # Small shapes consistent with the module: batch=2, in_ch=4, out_ch=8, 16x16.
    N, CIN, COUT, H, W = 2, 4, 8, 16, 16

    key = jax.random.PRNGKey(0)
    kx, kw_, kb, kg, kbt = jax.random.split(key, 5)
    x = jax.random.normal(kx, (N, CIN, H, W), dtype=jnp.float32)
    weight = 0.1 * jax.random.normal(kw_, (COUT, CIN, KH, KW), dtype=jnp.float32)
    bias = 0.05 * jax.random.normal(kb, (COUT,), dtype=jnp.float32)
    gamma = 1.0 + 0.1 * jax.random.normal(kg, (COUT,), dtype=jnp.float32)
    beta = 0.05 * jax.random.normal(kbt, (COUT,), dtype=jnp.float32)

    ref = _reference(x, weight, bias, gamma, beta)

    # Strict correctness check: same kernel structure, f32 operands throughout.
    out_f32 = conv_block(x, weight, bias, gamma, beta, compute_dtype=jnp.float32)
    jax.block_until_ready(out_f32)
    assert out_f32.shape == (N, COUT, H // 2, W // 2)
    assert jnp.allclose(out_f32, ref, atol=1e-4, rtol=1e-4)

    # Performance path: bf16 MXU operands + bf16 pre-BN intermediate,
    # f32 accumulation / BN statistics.
    out = conv_block(x, weight, bias, gamma, beta)
    jax.block_until_ready(out)
    assert out.shape == (N, COUT, H // 2, W // 2)
    assert jnp.allclose(out, ref, atol=3e-2, rtol=3e-2)

    print("KERNEL_OK")
</pallas_src>

<mosaic_0001>
module attributes {stable_mosaic.version = 11 : i64} {
  func.func @_conv_stats_kernel(%arg0: i32, %arg1: i32, %arg2: memref<1x8x9x16xf32, #tpu.memory_space<vmem>>, %arg3: memref<1x1x9x16xf32, #tpu.memory_space<vmem>>, %arg4: memref<4x16x128xf32, #tpu.memory_space<vmem>>, %arg5: memref<64x128xf32, #tpu.memory_space<vmem>>, %arg6: memref<1x2x128xf32, #tpu.memory_space<vmem>>) attributes {dimension_semantics = [#tpu.dimension_semantics<parallel>, #tpu.dimension_semantics<parallel>], iteration_bounds = array<i64: 2, 1>, scalar_prefetch = 0 : i64, scratch_operands = 0 : i64, tpu.core_type = #tpu.core_type<tc>, window_params = [{transform_indices = @transform_0, window_bounds = array<i64: 1, 8, 9, 16>}, {transform_indices = @transform_1, window_bounds = array<i64: 1, 1, 9, 16>}, {pipeline_mode = #tpu.pipeline_mode<synchronous>, transform_indices = @transform_2, window_bounds = array<i64: 4, 16, 128>}, {transform_indices = @transform_3, window_bounds = array<i64: 64, 128>}, {transform_indices = @transform_4, window_bounds = array<i64: 1, 2, 128>}]} {
    %c0 = arith.constant 0 : index
    %c0_0 = arith.constant 0 : index
    %c0_1 = arith.constant 0 : index
    %c0_2 = arith.constant 0 : index
    %0 = vector.load %arg2[%c0, %c0_0, %c0_1, %c0_2] : memref<1x8x9x16xf32, #tpu.memory_space<vmem>>, vector<1x8x9x16xf32>
    %1 = vector.shape_cast %0 : vector<1x8x9x16xf32> to vector<8x9x16xf32>
    %c0_3 = arith.constant 0 : index
    %c0_4 = arith.constant 0 : index
    %c0_5 = arith.constant 0 : index
    %c0_6 = arith.constant 0 : index
    %2 = vector.load %arg3[%c0_3, %c0_4, %c0_5, %c0_6] : memref<1x1x9x16xf32, #tpu.memory_space<vmem>>, vector<1x1x9x16xf32>
    %3 = vector.shape_cast %2 : vector<1x1x9x16xf32> to vector<1x9x16xf32>
    %4 = tpu.concatenate %1, %3 in 0 : vector<8x9x16xf32>, vector<1x9x16xf32> -> vector<9x9x16xf32>
    %cst = arith.constant 0.000000e+00 : f32
    %5 = vector.broadcast %cst : f32 to vector<9x9x16xf32>
    %6 = arith.cmpf oge, %4, %5 : vector<9x9x16xf32>
    %cst_7 = arith.constant 2.000000e-01 : f32
    %7 = vector.broadcast %cst_7 : f32 to vector<9x9x16xf32>
    %8 = arith.mulf %4, %7 : vector<9x9x16xf32>
    %9 = arith.select %6, %4, %8 : vector<9x9x16xi1>, vector<9x9x16xf32>
    %10 = vector.extract_strided_slice %9 {offsets = [0, 0, 0], sizes = [8, 8, 16], strides = [1, 1, 1]} : vector<9x9x16xf32> to vector<8x8x16xf32>
    %11 = vector.shape_cast %10 : vector<8x8x16xf32> to vector<64x16xf32>
    %c0_8 = arith.constant 0 : index
    %c0_9 = arith.constant 0 : index
    %c0_10 = arith.constant 0 : index
    %12 = vector.load %arg4[%c0_8, %c0_9, %c0_10] : memref<4x16x128xf32, #tpu.memory_space<vmem>>, vector<1x16x128xf32>
    %13 = vector.shape_cast %12 : vector<1x16x128xf32> to vector<16x128xf32>
    %cst_11 = arith.constant dense<0.000000e+00> : vector<64x128xf32>
    %14 = tpu.matmul %11, %13, %cst_11 {dimension_numbers = #tpu.dot_dimension_numbers<[1], [0], [0], [1], [0, 0, 1, 1], [], []>} : vector<64x16xf32>, vector<16x128xf32>, vector<64x128xf32> -> vector<64x128xf32>
    %15 = vector.extract_strided_slice %9 {offsets = [0, 1, 0], sizes = [8, 8, 16], strides = [1, 1, 1]} : vector<9x9x16xf32> to vector<8x8x16xf32>
    %16 = vector.shape_cast %15 : vector<8x8x16xf32> to vector<64x16xf32>
    %c1 = arith.constant 1 : index
    %c0_12 = arith.constant 0 : index
    %c0_13 = arith.constant 0 : index
    %17 = vector.load %arg4[%c1, %c0_12, %c0_13] : memref<4x16x128xf32, #tpu.memory_space<vmem>>, vector<1x16x128xf32>
    %18 = vector.shape_cast %17 : vector<1x16x128xf32> to vector<16x128xf32>
    %cst_14 = arith.constant dense<0.000000e+00> : vector<64x128xf32>
    %19 = tpu.matmul %16, %18, %cst_14 {dimension_numbers = #tpu.dot_dimension_numbers<[1], [0], [0], [1], [0, 0, 1, 1], [], []>} : vector<64x16xf32>, vector<16x128xf32>, vector<64x128xf32> -> vector<64x128xf32>
    %20 = arith.addf %14, %19 : vector<64x128xf32>
    %21 = vector.extract_strided_slice %9 {offsets = [1, 0, 0], sizes = [8, 8, 16], strides = [1, 1, 1]} : vector<9x9x16xf32> to vector<8x8x16xf32>
    %22 = vector.shape_cast %21 : vector<8x8x16xf32> to vector<64x16xf32>
    %c2 = arith.constant 2 : index
    %c0_15 = arith.constant 0 : index
    %c0_16 = arith.constant 0 : index
    %23 = vector.load %arg4[%c2, %c0_15, %c0_16] : memref<4x16x128xf32, #tpu.memory_space<vmem>>, vector<1x16x128xf32>
    %24 = vector.shape_cast %23 : vector<1x16x128xf32> to vector<16x128xf32>
    %cst_17 = arith.constant dense<0.000000e+00> : vector<64x128xf32>
    %25 = tpu.matmul %22, %24, %cst_17 {dimension_numbers = #tpu.dot_dimension_numbers<[1], [0], [0], [1], [0, 0, 1, 1], [], []>} : vector<64x16xf32>, vector<16x128xf32>, vector<64x128xf32> -> vector<64x128xf32>
    %26 = arith.addf %20, %25 : vector<64x128xf32>
    %27 = vector.extract_strided_slice %9 {offsets = [1, 1, 0], sizes = [8, 8, 16], strides = [1, 1, 1]} : vector<9x9x16xf32> to vector<8x8x16xf32>
    %28 = vector.shape_cast %27 : vector<8x8x16xf32> to vector<64x16xf32>
    %c3 = arith.constant 3 : index
    %c0_18 = arith.constant 0 : index
    %c0_19 = arith.constant 0 : index
    %29 = vector.load %arg4[%c3, %c0_18, %c0_19] : memref<4x16x128xf32, #tpu.memory_space<vmem>>, vector<1x16x128xf32>
    %30 = vector.shape_cast %29 : vector<1x16x128xf32> to vector<16x128xf32>
    %cst_20 = arith.constant dense<0.000000e+00> : vector<64x128xf32>
    %31 = tpu.matmul %28, %30, %cst_20 {dimension_numbers = #tpu.dot_dimension_numbers<[1], [0], [0], [1], [0, 0, 1, 1], [], []>} : vector<64x16xf32>, vector<16x128xf32>, vector<64x128xf32> -> vector<64x128xf32>
    %32 = arith.addf %26, %31 : vector<64x128xf32>
    %c0_21 = arith.constant 0 : index
    %c0_22 = arith.constant 0 : index
    %33 = vector.load %arg5[%c0_21, %c0_22] : memref<64x128xf32, #tpu.memory_space<vmem>>, vector<64x128xf32>
    tpu.vector_store %arg5[%c0_21, %c0_22], %32 {strides = array<i32>} : memref<64x128xf32, #tpu.memory_space<vmem>>, vector<64x128xf32>,
    %cst_23 = arith.constant dense<0.000000e+00> : vector<128xf32>
    %34 = vector.multi_reduction <add>, %32, %cst_23 [0] : vector<64x128xf32> to vector<128xf32>
    %35 = vector.shape_cast %34 : vector<128xf32> to vector<1x128xf32>
    %cst_24 = arith.constant 1.562500e-02 : f32
    %36 = vector.broadcast %cst_24 : f32 to vector<1x128xf32>
    %37 = arith.mulf %35, %36 : vector<1x128xf32>
    %38 = vector.broadcast %37 : vector<1x128xf32> to vector<64x128xf32>
    %39 = arith.subf %32, %38 : vector<64x128xf32>
    %40 = arith.mulf %39, %39 : vector<64x128xf32>
    %cst_25 = arith.constant dense<0.000000e+00> : vector<128xf32>
    %41 = vector.multi_reduction <add>, %40, %cst_25 [0] : vector<64x128xf32> to vector<128xf32>
    %42 = vector.shape_cast %41 : vector<128xf32> to vector<1x128xf32>
    %43 = tpu.concatenate %35, %42 in 0 : vector<1x128xf32>, vector<1x128xf32> -> vector<2x128xf32>
    %44 = vector.shape_cast %43 : vector<2x128xf32> to vector<1x2x128xf32>
    %c0_26 = arith.constant 0 : index
    %c0_27 = arith.constant 0 : index
    %c0_28 = arith.constant 0 : index
    %45 = vector.load %arg6[%c0_26, %c0_27, %c0_28] : memref<1x2x128xf32, #tpu.memory_space<vmem>>, vector<1x2x128xf32>
    tpu.vector_store %arg6[%c0_26, %c0_27, %c0_28], %44 {strides = array<i32>} : memref<1x2x128xf32, #tpu.memory_space<vmem>>, vector<1x2x128xf32>,
    return
  }
  func.func @transform_0(%arg0: i32, %arg1: i32) -> (i32, i32, i32, i32) {
    %c0_i32 = arith.constant 0 : i32
    %c0_i32_0 = arith.constant 0 : i32
    %c0_i32_1 = arith.constant 0 : i32
    return %arg0, %arg1, %c0_i32, %c0_i32_0 : i32, i32, i32, i32
  }
  func.func @transform_1(%arg0: i32, %arg1: i32) -> (i32, i32, i32, i32) {
    %c1_i32 = arith.constant 1 : i32
    %0 = arith.addi %arg1, %c1_i32 : i32
    %c8_i32 = arith.constant 8 : i32
    %1 = arith.muli %0, %c8_i32 : i32
    %c0_i32 = arith.constant 0 : i32
    %c0_i32_0 = arith.constant 0 : i32
    %c0_i32_1 = arith.constant 0 : i32
    return %arg0, %1, %c0_i32, %c0_i32_0 : i32, i32, i32, i32
  }
  func.func @transform_2(%arg0: i32, %arg1: i32) -> (i32, i32, i32) {
    %c0_i32 = arith.constant 0 : i32
    %c0_i32_0 = arith.constant 0 : i32
    %c0_i32_1 = arith.constant 0 : i32
    %c0_i32_2 = arith.constant 0 : i32
    return %c0_i32, %c0_i32_0, %c0_i32_1 : i32, i32, i32
  }
  func.func @transform_3(%arg0: i32, %arg1: i32) -> (i32, i32) {
    %c1_i32 = arith.constant 1 : i32
    %0 = arith.muli %arg0, %c1_i32 : i32
    %1 = arith.addi %0, %arg1 : i32
    %c0_i32 = arith.constant 0 : i32
    %c0_i32_0 = arith.constant 0 : i32
    return %1, %c0_i32 : i32, i32
  }
  func.func @transform_4(%arg0: i32, %arg1: i32) -> (i32, i32, i32) {
    %c1_i32 = arith.constant 1 : i32
    %0 = arith.muli %arg0, %c1_i32 : i32
    %1 = arith.addi %0, %arg1 : i32
    %c0_i32 = arith.constant 0 : i32
    %c0_i32_0 = arith.constant 0 : i32
    %c0_i32_1 = arith.constant 0 : i32
    return %1, %c0_i32, %c0_i32_0 : i32, i32, i32
  }
}

module attributes {stable_mosaic.version = 11 : i64} {
  func.func @_bn_apply_kernel(%arg0: i32, %arg1: memref<128x128xf32, #tpu.memory_space<vmem>>, %arg2: memref<1x128xf32, #tpu.memory_space<vmem>>, %arg3: memref<1x128xf32, #tpu.memory_space<vmem>>, %arg4: memref<128x128xf32, #tpu.memory_space<vmem>>) attributes {dimension_semantics = [#tpu.dimension_semantics<parallel>], iteration_bounds = array<i64: 1>, scalar_prefetch = 0 : i64, scratch_operands = 0 : i64, tpu.core_type = #tpu.core_type<tc>, window_params = [{transform_indices = @transform_0, window_bounds = array<i64: 128, 128>}, {pipeline_mode = #tpu.pipeline_mode<synchronous>, transform_indices = @transform_1, window_bounds = array<i64: 1, 128>}, {pipeline_mode = #tpu.pipeline_mode<synchronous>, transform_indices = @transform_2, window_bounds = array<i64: 1, 128>}, {transform_indices = @transform_3, window_bounds = array<i64: 128, 128>}]} {
    %c0 = arith.constant 0 : index
    %c0_0 = arith.constant 0 : index
    %0 = vector.load %arg1[%c0, %c0_0] : memref<128x128xf32, #tpu.memory_space<vmem>>, vector<128x128xf32>
    %c0_1 = arith.constant 0 : index
    %c0_2 = arith.constant 0 : index
    %1 = vector.load %arg2[%c0_1, %c0_2] : memref<1x128xf32, #tpu.memory_space<vmem>>, vector<1x128xf32>
    %2 = vector.broadcast %1 : vector<1x128xf32> to vector<128x128xf32>
    %3 = arith.mulf %0, %2 : vector<128x128xf32>
    %c0_3 = arith.constant 0 : index
    %c0_4 = arith.constant 0 : index
    %4 = vector.load %arg3[%c0_3, %c0_4] : memref<1x128xf32, #tpu.memory_space<vmem>>, vector<1x128xf32>
    %5 = vector.broadcast %4 : vector<1x128xf32> to vector<128x128xf32>
    %6 = arith.addf %3, %5 : vector<128x128xf32>
    %c0_5 = arith.constant 0 : index
    %c0_6 = arith.constant 0 : index
    %7 = vector.load %arg4[%c0_5, %c0_6] : memref<128x128xf32, #tpu.memory_space<vmem>>, vector<128x128xf32>
    tpu.vector_store %arg4[%c0_5, %c0_6], %6 {strides = array<i32>} : memref<128x128xf32, #tpu.memory_space<vmem>>, vector<128x128xf32>,
    return
  }
  func.func @transform_0(%arg0: i32) -> (i32, i32) {
    %c0_i32 = arith.constant 0 : i32
    %c0_i32_0 = arith.constant 0 : i32
    return %arg0, %c0_i32 : i32, i32
  }
  func.func @transform_1(%arg0: i32) -> (i32, i32) {
    %c0_i32 = arith.constant 0 : i32
    %c0_i32_0 = arith.constant 0 : i32
    %c0_i32_1 = arith.constant 0 : i32
    return %c0_i32, %c0_i32_0 : i32, i32
  }
  func.func @transform_2(%arg0: i32) -> (i32, i32) {
    %c0_i32 = arith.constant 0 : i32
    %c0_i32_0 = arith.constant 0 : i32
    %c0_i32_1 = arith.constant 0 : i32
    return %c0_i32, %c0_i32_0 : i32, i32
  }
  func.func @transform_3(%arg0: i32) -> (i32, i32) {
    %c0_i32 = arith.constant 0 : i32
    %c0_i32_0 = arith.constant 0 : i32
    return %arg0, %c0_i32 : i32, i32
  }
}

</mosaic_0001>

<llo_original>
// kernel: conv_block.3
$region0: #{conv_block.3}
  #allocation0 [shape = 'u32[]', space=smem, size = 0x4, offset = 0x4, fixed_abs, tag = 'smem constant byte address 0x4 - core index']
  #allocation1 [shape = 'u32[72,128]{1,0:T(1,128)}', space=vmem, size = 0x9000, scoped, tag = 'internal scratch']
  %s0 = inlined_call_operand.vmem [shape: f32[128,128], index: 0, kind: input, shape index: {}]
  %s1 = inlined_call_operand.vmem [shape: f32[1,128], index: 1, kind: input, shape index: {}]
  %s2 = inlined_call_operand.vmem [shape: f32[1,128], index: 2, kind: input, shape index: {}]
  %s3 = inlined_call_operand.vmem [shape: f32[128,128], index: 3, kind: output, shape index: {}]
  %s4 = sld [smem:[#allocation0]]
  $region22: #{conv_block.3} parent=0
    _
  %s6 = ssub.s32 1, %s4
  %s7 = scalar_select 0, %s6, %s4
  // Predicated region
  $region2: #{conv_block.3} parent=0 // pred_check
    _
  $region3: #{conv_block.3} parent=0 // pred_check_branch
    %9 = sbr.rel (0) target = $region5
  $region4: #{conv_block.3} parent=0 // pred_region
    _
  $region5: #{conv_block.3} parent=0 // pred_fallthru
    _
  // Predicated region
  $region6: #{conv_block.3} parent=0 // pred_check
    _
  $region7: #{conv_block.3} parent=0 // pred_check_branch
    %11 = sbr.rel (0) target = $region9
  $region8: #{conv_block.3} parent=0 // pred_region
    _
  $region9: #{conv_block.3} parent=0 // pred_fallthru
    _
  // Predicated region
  $region10: #{conv_block.3} parent=0 // pred_check
    _
  $region11: #{conv_block.3} parent=0 // pred_check_branch
    %13 = sbr.rel (0) target = $region13
  $region12: #{conv_block.3} parent=0 // pred_region
    _
  $region13: #{conv_block.3} parent=0 // pred_fallthru
    _
  %v14 = vld [vmem:[%s0] sm:$0xff]
  %v15 = vld [vmem:[%s0 + $0x8] sm:$0xff]
  %v16 = vld [vmem:[%s0 + $0x10] sm:$0xff]
  %v17 = vld [vmem:[%s0 + $0x18] sm:$0xff]
  %v18 = vld [vmem:[%s0 + $0x20] sm:$0xff]
  %v19 = vld [vmem:[%s0 + $0x28] sm:$0xff]
  %v20 = vld [vmem:[%s0 + $0x30] sm:$0xff]
  %v21 = vld [vmem:[%s0 + $0x38] sm:$0xff]
  %v22 = vld [vmem:[%s0 + $0x40] sm:$0xff]
  %v23 = vld [vmem:[%s0 + $0x48] sm:$0xff]
  %v24 = vld [vmem:[%s0 + $0x50] sm:$0xff]
  %v25 = vld [vmem:[%s0 + $0x58] sm:$0xff]
  %v26 = vld [vmem:[%s0 + $0x60] sm:$0xff]
  %v27 = vld [vmem:[%s0 + $0x68] sm:$0xff]
  %v28 = vld [vmem:[%s0 + $0x70] sm:$0xff]
  %v29 = vld [vmem:[%s0 + $0x78] sm:$0xff]
  %v30 = vld [vmem:[%s1] sm:$0x1]
  %v32 = vperm.slane %v30, 0
  %v34 = vmul.f32 %v14, %v32
  %v35 = vmul.f32 %v15, %v32
  %v36 = vmul.f32 %v16, %v32
  %v37 = vmul.f32 %v17, %v32
  %v38 = vmul.f32 %v18, %v32
  %v39 = vmul.f32 %v19, %v32
  %v40 = vmul.f32 %v20, %v32
  %v41 = vmul.f32 %v21, %v32
  %v42 = vmul.f32 %v22, %v32
  %v43 = vmul.f32 %v23, %v32
  %v44 = vmul.f32 %v24, %v32
  %v45 = vmul.f32 %v25, %v32
  %v46 = vmul.f32 %v26, %v32
  %v47 = vmul.f32 %v27, %v32
  %v48 = vmul.f32 %v28, %v32
  %v49 = vmul.f32 %v29, %v32
  %v50 = vld [vmem:[%s2] sm:$0x1]
  %v52 = vperm.slane %v50, 0
  %v54 = vadd.f32 %v34, %v52
  %v55 = vadd.f32 %v35, %v52
  %v56 = vadd.f32 %v36, %v52
  %v57 = vadd.f32 %v37, %v52
  %v58 = vadd.f32 %v38, %v52
  %v59 = vadd.f32 %v39, %v52
  %v60 = vadd.f32 %v40, %v52
  %v61 = vadd.f32 %v41, %v52
  %v62 = vadd.f32 %v42, %v52
  %v63 = vadd.f32 %v43, %v52
  %v64 = vadd.f32 %v44, %v52
  %v65 = vadd.f32 %v45, %v52
  %v66 = vadd.f32 %v46, %v52
  %v67 = vadd.f32 %v47, %v52
  %v68 = vadd.f32 %v48, %v52
  %v69 = vadd.f32 %v49, %v52
  %70 = vst [vmem:[%s3] sm:$0xff] %v54
  %71 = vst [vmem:[%s3 + $0x8] sm:$0xff] %v55
  %72 = vst [vmem:[%s3 + $0x10] sm:$0xff] %v56
  %73 = vst [vmem:[%s3 + $0x18] sm:$0xff] %v57
  %74 = vst [vmem:[%s3 + $0x20] sm:$0xff] %v58
  %75 = vst [vmem:[%s3 + $0x28] sm:$0xff] %v59
  %76 = vst [vmem:[%s3 + $0x30] sm:$0xff] %v60
  %77 = vst [vmem:[%s3 + $0x38] sm:$0xff] %v61
  %78 = vst [vmem:[%s3 + $0x40] sm:$0xff] %v62
  %79 = vst [vmem:[%s3 + $0x48] sm:$0xff] %v63
  %80 = vst [vmem:[%s3 + $0x50] sm:$0xff] %v64
  %81 = vst [vmem:[%s3 + $0x58] sm:$0xff] %v65
  %82 = vst [vmem:[%s3 + $0x60] sm:$0xff] %v66
  %83 = vst [vmem:[%s3 + $0x68] sm:$0xff] %v67
  %84 = vst [vmem:[%s3 + $0x70] sm:$0xff] %v68
  %85 = vst [vmem:[%s3 + $0x78] sm:$0xff] %v69
  // Predicated region
  $region14: #{conv_block.3} parent=0 // pred_check
    _
  $region15: #{conv_block.3} parent=0 // pred_check_branch
    %87 = sbr.rel (0) target = $region17
  $region16: #{conv_block.3} parent=0 // pred_region
    _
  $region17: #{conv_block.3} parent=0 // pred_fallthru
    _
  // Predicated region
  $region18: #{conv_block.3} parent=0 // pred_check
    _
  $region19: #{conv_block.3} parent=0 // pred_check_branch
    %89 = sbr.rel (0) target = $region21
  $region20: #{conv_block.3} parent=0 // pred_region
    _
  $region21: #{conv_block.3} parent=0 // pred_fallthru
    _

// kernel: conv_block.2
$region0: #{conv_block.2}
  #allocation0 [shape = 'u32[]', space=smem, size = 0x4, offset = 0x4, fixed_abs, tag = 'smem constant byte address 0x4 - core index']
  #allocation1 [shape = 'u32[72,128]{1,0:T(1,128)}', space=vmem, size = 0x9000, scoped, tag = 'internal scratch']
  %s0 = inlined_call_operand.vmem [shape: f32[2,9,9,16], index: 0, kind: input, shape index: {}, may-alias: {0,1}]
  %s1 = inlined_call_operand.vmem [shape: f32[2,9,9,16], index: 1, kind: input, shape index: {}, may-alias: {0,1}]
  %s2 = inlined_call_operand.vmem [shape: f32[4,16,128], index: 2, kind: input, shape index: {}]
  %s3 = inlined_call_operand.vmem [shape: f32[128,128], index: 3, kind: output, shape index: {0}]
  %s4 = inlined_call_operand.vmem [shape: f32[2,2,128], index: 4, kind: output, shape index: {1}]
  %5 = xla_tuple %s3, %s4
  %s6 = sld [smem:[#allocation0]]
  $region53: #{conv_block.2} parent=0
    _
  %s8 = ssub.s32 1, %s6
  %s9 = scalar_select 0, %s8, %s6
  loop: start=0, step=1, limit=4
  $region2: #{conv_block.2} parent=0 // loop_pre_header
    _
  $region3: #{conv_block.2} parent=0 // loop_header
    %s11 = sphi 0, %s15
    %p12 = scmp.ge.s32.totalorder %s11, 4
    %s18 = sphi 0, %s30
    %s19 = sphi 0, %s26
    %s20 = sphi 0, %s18
    %s21 = sphi 0, %s19
    %s22 = sphi 0, %s20
    %s23 = sphi 0, %s21
    %s35 = sphi 0, %s37
    %s38 = sphi 0, %s35
    %s39 = sphi 0, %s38
    %s55 = sphi 0, %s39
    %s67 = sphi 0, %s69
    %s70 = sphi 0, %s67
    %s71 = sphi 0, %s70
    %s87 = sphi 0, %s71
    %s91 = sphi 0, %s91
    %s93 = sphi 0, %s91
    %s94 = sphi 0, %s93
    %s108 = sphi 0, %s94
    %s116 = sphi 0, %s118
    %s119 = sphi 0, %s116
    %s120 = sphi 0, %s119
    %s136 = sphi 0, %s120
    %s144 = sphi 0, %s146
    %s147 = sphi 0, %s144
    %s148 = sphi 0, %s147
    %s164 = sphi 0, %s148
  $region4: #{conv_block.2} parent=0 // loop_header_branch
    %14 = sbr.rel (%p12) target = $region8
  $region5: #{conv_block.2} parent=0 // loop_body
    %s16 = ssub.s32 %s11, 1
    %s17 = ssub.s32 %s11, 2
    %s24 = sadd.s32 1, %s19
    %p25 = scmp.ge.s32.totalorder %s24, 1
    %s26 = scalar_select %p25, 0, %s24
    %s27 = sadd.s32 1, %s18
    %s28 = scalar_select %p25, %s27, %s18
    %p29 = scmp.ge.s32.totalorder %s28, 2
    %s30 = scalar_select %p29, 0, %s28
    %s31 = ssub.s32 %s18, %s30
    %s32 = ssub.s32 %s19, %s26
    %s33 = sor.u32 %s31, %s32
    %p34 = scmp.eq.s32.totalorder %s33, 0
    %s36 = sadd.s32 %s35, 1
    %s37 = scalar_select %p34, %s35, %s36
    %p40 = pneg %p34
    %p41 = scmp.eq.s32.totalorder %s11, 1
    %p42 = por %p40, %p41
    %p43 = scmp.ne.s32.totalorder %s35, %s38
    %p44 = scmp.eq.s32.totalorder %s11, 0
    %p45 = por %p43, %p44
    %p46 = scmp.ne.s32.totalorder %s35, %s38
    %p47 = scmp.eq.s32.totalorder %s16, 1
    %p48 = por %p46, %p47
    %p49 = scmp.ne.s32.totalorder %s38, %s39
    %p50 = scmp.eq.s32.totalorder %s16, 0
    %p51 = por %p49, %p50
    %p52 = scmp.ne.s32.totalorder %s38, %s39
    %p53 = scmp.eq.s32.totalorder %s17, 1
    %p54 = por %p52, %p53
    %p56 = scmp.ne.s32.totalorder %s39, %s55
    %p57 = scmp.eq.s32.totalorder %s17, 0
    %p58 = por %p56, %p57
    %s59 = sadd.s32 %s19, 1
    %s60 = smul.u32 %s59, 8
    %s61 = sadd.s32 %s26, 1
    %s62 = smul.u32 %s61, 8
    %s63 = ssub.s32 %s18, %s30
    %s64 = ssub.s32 %s60, %s62
    %s65 = sor.u32 %s63, %s64
    %p66 = scmp.eq.s32.totalorder %s65, 0
    %s68 = sadd.s32 %s67, 1
    %s69 = scalar_select %p66, %s67, %s68
    %p72 = pneg %p66
    %p73 = scmp.eq.s32.totalorder %s11, 1
    %p74 = por %p72, %p73
    %p75 = scmp.ne.s32.totalorder %s67, %s70
    %p76 = scmp.eq.s32.totalorder %s11, 0
    %p77 = por %p75, %p76
    %p78 = scmp.ne.s32.totalorder %s67, %s70
    %p79 = scmp.eq.s32.totalorder %s16, 1
    %p80 = por %p78, %p79
    %p81 = scmp.ne.s32.totalorder %s70, %s71
    %p82 = scmp.eq.s32.totalorder %s16, 0
    %p83 = por %p81, %p82
    %p84 = scmp.ne.s32.totalorder %s70, %s71
    %p85 = scmp.eq.s32.totalorder %s17, 1
    %p86 = por %p84, %p85
    %p88 = scmp.ne.s32.totalorder %s71, %s87
    %p89 = scmp.eq.s32.totalorder %s17, 0
    %p90 = por %p88, %p89
    %s92 = sadd.s32 %s91, 1
    %p95 = scmp.eq.s32.totalorder %s11, 1
    %p96 = scmp.ne.s32.totalorder %s91, %s93
    %p97 = scmp.eq.s32.totalorder %s11, 0
    %p98 = por %p96, %p97
    %p99 = scmp.ne.s32.totalorder %s91, %s93
    %p100 = scmp.eq.s32.totalorder %s16, 1
    %p101 = por %p99, %p100
    %p102 = scmp.ne.s32.totalorder %s93, %s94
    %p103 = scmp.eq.s32.totalorder %s16, 0
    %p104 = por %p102, %p103
    %p105 = scmp.ne.s32.totalorder %s93, %s94
    %p106 = scmp.eq.s32.totalorder %s17, 1
    %p107 = por %p105, %p106
    %p109 = scmp.ne.s32.totalorder %s94, %s108
    %p110 = scmp.eq.s32.totalorder %s17, 0
    %p111 = por %p109, %p110
    %s112 = sadd.s32 %s18, %s19
    %s113 = sadd.s32 %s30, %s26
    %s114 = ssub.s32 %s112, %s113
    %p115 = scmp.eq.s32.totalorder %s114, 0
    %s117 = sadd.s32 %s116, 1
    %s118 = scalar_select %p115, %s116, %s117
    %p121 = pneg %p115
    %p122 = scmp.eq.s32.totalorder %s11, 1
    %p123 = por %p121, %p122
    %p124 = scmp.ne.s32.totalorder %s116, %s119
    %p125 = scmp.eq.s32.totalorder %s11, 0
    %p126 = por %p124, %p125
    %p127 = scmp.ne.s32.totalorder %s116, %s119
    %p128 = scmp.eq.s32.totalorder %s16, 1
    %p129 = por %p127, %p128
    %p130 = scmp.ne.s32.totalorder %s119, %s120
    %p131 = scmp.eq.s32.totalorder %s16, 0
    %p132 = por %p130, %p131
    %p133 = scmp.ne.s32.totalorder %s119, %s120
    %p134 = scmp.eq.s32.totalorder %s17, 1
    %p135 = por %p133, %p134
    %p137 = scmp.ne.s32.totalorder %s120, %s136
    %p138 = scmp.eq.s32.totalorder %s17, 0
    %p139 = por %p137, %p138
    %s140 = sadd.s32 %s18, %s19
    %s141 = sadd.s32 %s30, %s26
    %s142 = ssub.s32 %s140, %s141
    %p143 = scmp.eq.s32.totalorder %s142, 0
    %s145 = sadd.s32 %s144, 1
    %s146 = scalar_select %p143, %s144, %s145
    %p149 = pneg %p143
    %p150 = scmp.eq.s32.totalorder %s11, 1
    %p151 = por %p149, %p150
    %p152 = scmp.ne.s32.totalorder %s144, %s147
    %p153 = scmp.eq.s32.totalorder %s11, 0
    %p154 = por %p152, %p153
    %p155 = scmp.ne.s32.totalorder %s144, %s147
    %p156 = scmp.eq.s32.totalorder %s16, 1
    %p157 = por %p155, %p156
    %p158 = scmp.ne.s32.totalorder %s147, %s148
    %p159 = scmp.eq.s32.totalorder %s16, 0
    %p160 = por %p158, %p159
    %p161 = scmp.ne.s32.totalorder %s147, %s148
    %p162 = scmp.eq.s32.totalorder %s17, 1
    %p163 = por %p161, %p162
    %p165 = scmp.ne.s32.totalorder %s148, %s164
    %p166 = scmp.eq.s32.totalorder %s17, 0
    %p167 = por %p165, %p166
    %p168 = scmp.le.s32.totalorder 1, %s11
    %p169 = scmp.lt.s32.totalorder %s11, 3
    %p170 = pnand %p168, %p169
    %p171 = pneg %p170
    // Predicated region
    $region9: #{conv_block.2} parent=5 // pred_check
      _
    $region10: #{conv_block.2} parent=5 // pred_check_branch
      %173 = sbr.rel (%p170) target = $region12
    $region11: #{conv_block.2} parent=5 // pred_region
      %s174 = ssub.s32 %s11, 1
      // Predicated region
      $region13: #{conv_block.2} parent=11 // pred_check
        %p175 = pneg %p104
      $region14: #{conv_block.2} parent=11 // pred_check_branch
        %177 = sbr.rel (%p175) target = $region16
      $region15: #{conv_block.2} parent=11 // pred_region
        _
      $region16: #{conv_block.2} parent=11 // pred_fallthru
        _
    $region12: #{conv_block.2} parent=5 // pred_fallthru
      _
    %p178 = scmp.lt.s32.totalorder %s11, 2
    // Predicated region
    $region17: #{conv_block.2} parent=5 // pred_check
      %p179 = pneg %p178
    $region18: #{conv_block.2} parent=5 // pred_check_branch
      %181 = sbr.rel (%p179) target = $region20
    $region19: #{conv_block.2} parent=5 // pred_region
      // Predicated region
      $region21: #{conv_block.2} parent=19 // pred_check
        %p182 = pneg %p45
      $region22: #{conv_block.2} parent=19 // pred_check_branch
        %184 = sbr.rel (%p182) target = $region24
      $region23: #{conv_block.2} parent=19 // pred_region
        %s185 = smul.u32 8, %s19
        %s186 = ssub.s32 9, %s185
        %p187 = scmp.lt.s32.totalorder %s186, 8
        %s188 = scalar_select %p187, %s186, 8
        %s189 = smul.u32 8, %s188
        %s190 = smul.u32 %s189, 2
        %p191 = scmp.lt.s32.totalorder %s18, 1
        %s192 = scalar_select %p191, %s18, 1
        %p193 = scmp.lt.s32.totalorder %s185, 8
        %s194 = scalar_select %p193, %s185, 8
        %s195 = smul.addr %s194, 2
        %s196 = smul.addr %s192, 18
        %s197 = sadd.s32 %s195, %s196
        %s198 = smul.addr %s197, 8
        %s199 = scalar_lea.vmem %s0, %s198
        %s200 = smul.u32 8, %s19
        %s201 = ssub.s32 9, %s200
        %p202 = scmp.lt.s32.totalorder %s201, 8
        %s203 = scalar_select %p202, %s201, 8
        %s204 = smul.u32 8, %s203
        %s205 = smul.u32 %s204, 2
      $region24: #{conv_block.2} parent=19 // pred_fallthru
        _
      // Predicated region
      $region25: #{conv_block.2} parent=19 // pred_check
        %p206 = pneg %p77
      $region26: #{conv_block.2} parent=19 // pred_check_branch
        %208 = sbr.rel (%p206) target = $region28
      $region27: #{conv_block.2} parent=19 // pred_region
        %s209 = sadd.s32 %s19, 1
        %s210 = smul.u32 %s209, 8
        %p211 = scmp.lt.s32.totalorder %s18, 1
        %s212 = scalar_select %p211, %s18, 1
        %p213 = scmp.lt.s32.totalorder %s210, 8
        %s214 = scalar_select %p213, %s210, 8
        %s215 = smul.addr %s214, 2
        %s216 = smul.addr %s212, 18
        %s217 = sadd.s32 %s215, %s216
        %s218 = smul.addr %s217, 8
        %s219 = scalar_lea.vmem %s1, %s218
        %s220 = sadd.s32 %s19, 1
        %s221 = smul.u32 %s220, 8
      $region28: #{conv_block.2} parent=19 // pred_fallthru
        _
    $region20: #{conv_block.2} parent=5 // pred_fallthru
      _
    %p222 = scmp.le.s32.totalorder 1, %s11
    %p223 = scmp.lt.s32.totalorder %s11, 3
    %p224 = pnand %p222, %p223
    %p225 = pneg %p224
    // Predicated region
    $region29: #{conv_block.2} parent=5 // pred_check
      _
    $region30: #{conv_block.2} parent=5 // pred_check_branch
      %227 = sbr.rel (%p224) target = $region32
    $region31: #{conv_block.2} parent=5 // pred_region
      %s228 = ssub.s32 %s11, 1
      %s229 = smul.u32 8, %s21
      %s230 = ssub.s32 9, %s229
      %p231 = scmp.lt.s32.totalorder %s230, 8
      %s232 = scalar_select %p231, %s230, 8
      %s233 = smul.u32 8, %s232
      %s234 = smul.u32 %s233, 2
      %p235 = scmp.lt.s32.totalorder %s20, 1
      %s236 = scalar_select %p235, %s20, 1
      %p237 = scmp.lt.s32.totalorder %s229, 8
      %s238 = scalar_select %p237, %s229, 8
      %s239 = smul.addr %s238, 2
      %s240 = smul.addr %s236, 18
      %s241 = sadd.s32 %s239, %s240
      %s242 = smul.addr %s241, 8
      %s243 = scalar_lea.vmem %s0, %s242
      %p244 = pneg %p51
      %p245 = pneg %p48
      %s246 = sadd.s32 %s21, 1
      %s247 = smul.u32 %s246, 8
      %p248 = scmp.lt.s32.totalorder %s20, 1
      %s249 = scalar_select %p248, %s20, 1
      %p250 = scmp.lt.s32.totalorder %s247, 8
      %s251 = scalar_select %p250, %s247, 8
      %s252 = smul.addr %s251, 2
      %s253 = smul.addr %s249, 18
      %s254 = sadd.s32 %s252, %s253
      %s255 = smul.addr %s254, 8
      %s256 = scalar_lea.vmem %s1, %s255
      %p257 = pneg %p83
      %p258 = pneg %p80
      %p259 = pneg %p104
      %p260 = pneg %p101
      %p261 = pneg %p132
      %p262 = pneg %p129
      %s263 = sadd.s32 %s20, %s21
      %s264 = smul.u32 8, %s263
      %p265 = scmp.lt.s32.totalorder %s264, 15
      %s266 = scalar_select %p265, %s264, 15
      %s267 = smul.addr %s266, 8
      %s268 = scalar_lea.vmem %s3, %s267
      %p269 = pneg %p160
      %p270 = pneg %p157
      %s271 = sadd.s32 %s20, %s21
      %p272 = scmp.lt.s32.totalorder %s271, 1
      %s273 = scalar_select %p272, %s271, 1
      %s274 = smul.addr %s273, 2
      %s275 = scalar_lea.vmem %s4, %s274
      %s276 = smul.u32 8, %s21
      %s277 = ssub.s32 9, %s276
      %p278 = scmp.lt.s32.totalorder %s277, 8
      %s279 = scalar_select %p278, %s277, 8
      %s280 = smul.u32 8, %s279
      %s281 = smul.u32 %s280, 2
      %p282 = scmp.lt.s32.totalorder %s20, 1
      %s283 = scalar_select %p282, %s20, 1
      %p284 = scmp.lt.s32.totalorder %s276, 8
      %s285 = scalar_select %p284, %s276, 8
      %s286 = smul.addr %s285, 2
      %s287 = smul.addr %s283, 18
      %s288 = sadd.s32 %s286, %s287
      %s289 = smul.addr %s288, 8
      %s290 = scalar_lea.vmem %s0, %s289
      %s291 = smul.u32 8, %s21
      %s292 = ssub.s32 9, %s291
      %p293 = scmp.lt.s32.totalorder %s292, 8
      %s294 = scalar_select %p293, %s292, 8
      %s295 = smul.u32 8, %s294
      %s296 = smul.u32 %s295, 2
      %s297 = sadd.s32 %s21, 1
      %s298 = smul.u32 %s297, 8
      %p299 = scmp.lt.s32.totalorder %s20, 1
      %s300 = scalar_select %p299, %s20, 1
      %p301 = scmp.lt.s32.totalorder %s298, 8
      %s302 = scalar_select %p301, %s298, 8
      %s303 = smul.addr %s302, 2
      %s304 = smul.addr %s300, 18
      %s305 = sadd.s32 %s303, %s304
      %s306 = smul.addr %s305, 8
      %s307 = scalar_lea.vmem %s1, %s306
      %s308 = sadd.s32 %s21, 1
      %s309 = smul.u32 %s308, 8
      %s310 = sadd.s32 %s20, %s21
      %s311 = smul.u32 8, %s310
      %p312 = scmp.lt.s32.totalorder %s311, 15
      %s313 = scalar_select %p312, %s311, 15
      %s314 = smul.addr %s313, 8
      %s315 = scalar_lea.vmem %s3, %s314
      %s316 = sadd.s32 %s20, %s21
      %s317 = smul.u32 8, %s316
      %s318 = sadd.s32 %s20, %s21
      %p319 = scmp.lt.s32.totalorder %s318, 1
      %s320 = scalar_select %p319, %s318, 1
      %s321 = smul.addr %s320, 2
      %s322 = scalar_lea.vmem %s4, %s321
      %s323 = sadd.s32 %s20, %s21
      %v324 = vld [vmem:[%s290] sm:$0xff]
      %v325 = vld [vmem:[%s290 + $0x8] sm:$0x1]
      %v326 = vld [vmem:[%s290 + $0x10] sm:$0xff]
      %v327 = vld [vmem:[%s290 + $0x18] sm:$0x1]
      %v328 = vld [vmem:[%s290 + $0x20] sm:$0xff]
      %v329 = vld [vmem:[%s290 + $0x28] sm:$0x1]
      %v330 = vld [vmem:[%s290 + $0x30] sm:$0xff]
      %v331 = vld [vmem:[%s290 + $0x38] sm:$0x1]
      %v332 = vld [vmem:[%s290 + $0x40] sm:$0xff]
      %v333 = vld [vmem:[%s290 + $0x48] sm:$0x1]
      %v334 = vld [vmem:[%s290 + $0x50] sm:$0xff]
      %v335 = vld [vmem:[%s290 + $0x58] sm:$0x1]
      %v336 = vld [vmem:[%s290 + $0x60] sm:$0xff]
      %v337 = vld [vmem:[%s290 + $0x68] sm:$0x1]
      %v338 = vld [vmem:[%s290 + $0x70] sm:$0xff]
      %v339 = vld [vmem:[%s290 + $0x78] sm:$0x1]
      %v340 = vld [vmem:[%s307] sm:$0xff]
      %v341 = vld [vmem:[%s307 + $0x8] sm:$0x1]
      %vm342 = vcmp.ge.f32.partialorder %v324, 0.0
      %vm343 = vcmp.ge.f32.partialorder %v325, 0.0
      %vm344 = vcmp.ge.f32.partialorder %v326, 0.0
      %vm345 = vcmp.ge.f32.partialorder %v327, 0.0
      %vm346 = vcmp.ge.f32.partialorder %v328, 0.0
      %vm347 = vcmp.ge.f32.partialorder %v329, 0.0
      %vm348 = vcmp.ge.f32.partialorder %v330, 0.0
      %vm349 = vcmp.ge.f32.partialorder %v331, 0.0
      %vm350 = vcmp.ge.f32.partialorder %v332, 0.0
      %vm351 = vcmp.ge.f32.partialorder %v333, 0.0
      %vm352 = vcmp.ge.f32.partialorder %v334, 0.0
      %vm353 = vcmp.ge.f32.partialorder %v335, 0.0
      %vm354 = vcmp.ge.f32.partialorder %v336, 0.0
      %vm355 = vcmp.ge.f32.partialorder %v337, 0.0
      %vm356 = vcmp.ge.f32.partialorder %v338, 0.0
      %vm357 = vcmp.ge.f32.partialorder %v339, 0.0
      %vm358 = vcmp.ge.f32.partialorder %v340, 0.0
      %vm359 = vcmp.ge.f32.partialorder %v341, 0.0
      %v360 = vmul.f32 %v324, 0.2
      %v361 = vmul.f32 %v325, 0.2
      %v362 = vmul.f32 %v326, 0.2
      %v363 = vmul.f32 %v327, 0.2
      %v364 = vmul.f32 %v328, 0.2
      %v365 = vmul.f32 %v329, 0.2
      %v366 = vmul.f32 %v330, 0.2
      %v367 = vmul.f32 %v331, 0.2
      %v368 = vmul.f32 %v332, 0.2
      %v369 = vmul.f32 %v333, 0.2
      %v370 = vmul.f32 %v334, 0.2
      %v371 = vmul.f32 %v335, 0.2
      %v372 = vmul.f32 %v336, 0.2
      %v373 = vmul.f32 %v337, 0.2
      %v374 = vmul.f32 %v338, 0.2
      %v375 = vmul.f32 %v339, 0.2
      %v376 = vmul.f32 %v340, 0.2
      %v377 = vmul.f32 %v341, 0.2
      %v378 = vsel %vm342, %v324, %v360
      %v379 = vsel %vm343, %v325, %v361
      %v380 = vsel %vm344, %v326, %v362
      %v381 = vsel %vm345, %v327, %v363
      %v382 = vsel %vm346, %v328, %v364
      %v383 = vsel %vm347, %v329, %v365
      %v384 = vsel %vm348, %v330, %v366
      %v385 = vsel %vm349, %v331, %v367
      %v386 = vsel %vm350, %v332, %v368
      %v387 = vsel %vm351, %v333, %v369
      %v388 = vsel %vm352, %v334, %v370
      %v389 = vsel %vm353, %v335, %v371
      %v390 = vsel %vm354, %v336, %v372
      %v391 = vsel %vm355, %v337, %v373
      %v392 = vsel %vm356, %v338, %v374
      %v393 = vsel %vm357, %v339, %v375
      %v394 = vsel %vm358, %v340, %v376
      %v395 = vsel %vm359, %v341, %v377
      %v396 = vld [vmem:[%s2] sm:$0xff]
      %v397 = vld [vmem:[%s2 + $0x8] sm:$0xff]
      %vm414 = vcmask 1046528
      %v415 = vrot.slane %v378, 1
      %v416 = vrot.slane %v379, 1
      %v417 = vsel %vm414, %v415, %v416
      %v418 = vrot.slane %v380, 1
      %v419 = vrot.slane %v381, 1
      %v420 = vsel %vm414, %v418, %v419
      %v421 = vrot.slane %v382, 1
      %v422 = vrot.slane %v383, 1
      %v423 = vsel %vm414, %v421, %v422
      %v424 = vrot.slane %v384, 1
      %v425 = vrot.slane %v385, 1
      %v426 = vsel %vm414, %v424, %v425
      %v427 = vrot.slane %v386, 1
      %v428 = vrot.slane %v387, 1
      %v429 = vsel %vm414, %v427, %v428
      %v430 = vrot.slane %v388, 1
      %v431 = vrot.slane %v389, 1
      %v432 = vsel %vm414, %v430, %v431
      %v433 = vrot.slane %v390, 1
      %v434 = vrot.slane %v391, 1
      %v435 = vsel %vm414, %v433, %v434
      %v436 = vrot.slane %v392, 1
      %v437 = vrot.slane %v393, 1
      %v438 = vsel %vm414, %v436, %v437
      %s439 = scalar_lea.vmem %s2, 16
      %v440 = vld [vmem:[%s439] sm:$0xff]
      %v441 = vld [vmem:[%s439 + $0x8] sm:$0xff]
      %vm442 = vcmask 130048
      %v443 = vsel %vm442, %v417, 0
      %v445 = vsel %vm442, %v420, 0
      %v447 = vsel %vm442, %v423, 0
      %v449 = vsel %vm442, %v426, 0
      %v451 = vsel %vm442, %v429, 0
      %v453 = vsel %vm442, %v432, 0
      %v455 = vsel %vm442, %v435, 0
      %v457 = vsel %vm442, %v438, 0
      %459 = vmatpush.msra.mxu0 0.0
      %460 = vmatpush.msra.mxu0 0.0
      %461 = vmatpush.msra.mxu0 0.0
      %462 = vmatpush.msra.mxu0 0.0
      %463 = vmatpush.msra.mxu0 0.0
      %464 = vmatpush.msra.mxu0 0.0
      %465 = vmatpush.msra.mxu0 0.0
      %466 = vmatpush.msra.mxu0 0.0
      %467 = vmatpush.msra.mxu0 0.0
      %468 = vmatpush.msra.mxu0 0.0
      %469 = vmatpush.msra.mxu0 0.0
      %470 = vmatpush.msra.mxu0 0.0
      %471 = vmatpush.msra.mxu0 0.0
      %472 = vmatpush.msra.mxu0 0.0
      %473 = vmatpush.msra.mxu0 %v441
      %474 = vmatpush.msra.mxu0 %v440
      %475 = vmatmul.f32.gmra.mxu0 %v443
      %v476 = vpop.f32.mrf.mxu0
      %v477 = vadd.f32 0.0, %v476
      %478 = vmatmul.f32.gmra.mxu0 %v445
      %v479 = vpop.f32.mrf.mxu0
      %v480 = vadd.f32 0.0, %v479
      %481 = vmatmul.f32.gmra.mxu0 %v447
      %v482 = vpop.f32.mrf.mxu0
      %v483 = vadd.f32 0.0, %v482
      %484 = vmatmul.f32.gmra.mxu0 %v449
      %v485 = vpop.f32.mrf.mxu0
      %v486 = vadd.f32 0.0, %v485
      %487 = vmatmul.f32.gmra.mxu0 %v451
      %v488 = vpop.f32.mrf.mxu0
      %v489 = vadd.f32 0.0, %v488
      %490 = vmatmul.f32.gmra.mxu0 %v453
      %v491 = vpop.f32.mrf.mxu0
      %v492 = vadd.f32 0.0, %v491
      %493 = vmatmul.f32.gmra.mxu0 %v455
      %v494 = vpop.f32.mrf.mxu0
      %v495 = vadd.f32 0.0, %v494
      %496 = vmatmul.f32.gmra.mxu0 %v457
      %v497 = vpop.f32.mrf.mxu0
      %v498 = vadd.f32 0.0, %v497
      %499 = vdwg.mxu0
      %v500 = vsel %vm442, %v378, 0
      %v502 = vsel %vm442, %v380, 0
      %v504 = vsel %vm442, %v382, 0
      %v506 = vsel %vm442, %v384, 0
      %v508 = vsel %vm442, %v386, 0
      %v510 = vsel %vm442, %v388, 0
      %v512 = vsel %vm442, %v390, 0
      %v514 = vsel %vm442, %v392, 0
      %516 = vmatpush.msra.mxu0 0.0
      %517 = vmatpush.msra.mxu0 0.0
      %518 = vmatpush.msra.mxu0 0.0
      %519 = vmatpush.msra.mxu0 0.0
      %520 = vmatpush.msra.mxu0 0.0
      %521 = vmatpush.msra.mxu0 0.0
      %522 = vmatpush.msra.mxu0 0.0
      %523 = vmatpush.msra.mxu0 0.0
      %524 = vmatpush.msra.mxu0 0.0
      %525 = vmatpush.msra.mxu0 0.0
      %526 = vmatpush.msra.mxu0 0.0
      %527 = vmatpush.msra.mxu0 0.0
      %528 = vmatpush.msra.mxu0 0.0
      %529 = vmatpush.msra.mxu0 0.0
      %530 = vmatpush.msra.mxu0 %v397
      %531 = vmatpush.msra.mxu0 %v396
      %532 = vmatmul.f32.gmra.mxu0 %v500
      %v533 = vpop.f32.mrf.mxu0
      %v534 = vadd.f32 %v477, %v533
      %535 = vmatmul.f32.gmra.mxu0 %v502
      %v536 = vpop.f32.mrf.mxu0
      %v537 = vadd.f32 %v480, %v536
      %538 = vmatmul.f32.gmra.mxu0 %v504
      %v539 = vpop.f32.mrf.mxu0
      %v540 = vadd.f32 %v483, %v539
      %541 = vmatmul.f32.gmra.mxu0 %v506
      %v542 = vpop.f32.mrf.mxu0
      %v543 = vadd.f32 %v486, %v542
      %544 = vmatmul.f32.gmra.mxu0 %v508
      %v545 = vpop.f32.mrf.mxu0
      %v546 = vadd.f32 %v489, %v545
      %547 = vmatmul.f32.gmra.mxu0 %v510
      %v548 = vpop.f32.mrf.mxu0
      %v549 = vadd.f32 %v492, %v548
      %550 = vmatmul.f32.gmra.mxu0 %v512
      %v551 = vpop.f32.mrf.mxu0
      %v552 = vadd.f32 %v495, %v551
      %553 = vmatmul.f32.gmra.mxu0 %v514
      %v554 = vpop.f32.mrf.mxu0
      %v555 = vadd.f32 %v498, %v554
      %556 = vdwg.mxu0
      %s557 = scalar_lea.vmem %s2, 32
      %v558 = vld [vmem:[%s557] sm:$0xff]
      %v559 = vld [vmem:[%s557 + $0x8] sm:$0xff]
      %v561 = vsel %vm442, %v394, 0
      %563 = vmatpush.msra.mxu0 0.0
      %564 = vmatpush.msra.mxu0 0.0
      %565 = vmatpush.msra.mxu0 0.0
      %566 = vmatpush.msra.mxu0 0.0
      %567 = vmatpush.msra.mxu0 0.0
      %568 = vmatpush.msra.mxu0 0.0
      %569 = vmatpush.msra.mxu0 0.0
      %570 = vmatpush.msra.mxu0 0.0
      %571 = vmatpush.msra.mxu0 0.0
      %572 = vmatpush.msra.mxu0 0.0
      %573 = vmatpush.msra.mxu0 0.0
      %574 = vmatpush.msra.mxu0 0.0
      %575 = vmatpush.msra.mxu0 0.0
      %576 = vmatpush.msra.mxu0 0.0
      %577 = vmatpush.msra.mxu0 %v559
      %578 = vmatpush.msra.mxu0 %v558
      %579 = vmatmul.f32.gmra.mxu0 %v502
      %v580 = vpop.f32.mrf.mxu0
      %v581 = vadd.f32 0.0, %v580
      %582 = vmatmul.f32.gmra.mxu0 %v504
      %v583 = vpop.f32.mrf.mxu0
      %v584 = vadd.f32 0.0, %v583
      %585 = vmatmul.f32.gmra.mxu0 %v506
      %v586 = vpop.f32.mrf.mxu0
      %v587 = vadd.f32 0.0, %v586
      %588 = vmatmul.f32.gmra.mxu0 %v508
      %v589 = vpop.f32.mrf.mxu0
      %v590 = vadd.f32 0.0, %v589
      %591 = vmatmul.f32.gmra.mxu0 %v510
      %v592 = vpop.f32.mrf.mxu0
      %v593 = vadd.f32 0.0, %v592
      %594 = vmatmul.f32.gmra.mxu0 %v512
      %v595 = vpop.f32.mrf.mxu0
      %v596 = vadd.f32 0.0, %v595
      %597 = vmatmul.f32.gmra.mxu0 %v514
      %v598 = vpop.f32.mrf.mxu0
      %v599 = vadd.f32 0.0, %v598
      %600 = vmatmul.f32.gmra.mxu0 %v561
      %v601 = vpop.f32.mrf.mxu0
      %v602 = vadd.f32 0.0, %v601
      %603 = vdwg.mxu0
      %v604 = vadd.f32 %v534, %v581
      %v605 = vadd.f32 %v537, %v584
      %v606 = vadd.f32 %v540, %v587
      %v607 = vadd.f32 %v543, %v590
      %v608 = vadd.f32 %v546, %v593
      %v609 = vadd.f32 %v549, %v596
      %v610 = vadd.f32 %v552, %v599
      %v611 = vadd.f32 %v555, %v602
      %v613 = vrot.slane %v394, 1
      %v614 = vrot.slane %v395, 1
      %v615 = vsel %vm414, %v613, %v614
      %s616 = scalar_lea.vmem %s2, 48
      %v617 = vld [vmem:[%s616] sm:$0xff]
      %v618 = vld [vmem:[%s616 + $0x8] sm:$0xff]
      %v619 = vsel %vm442, %v615, 0
      %621 = vmatpush.msra.mxu0 0.0
      %622 = vmatpush.msra.mxu0 0.0
      %623 = vmatpush.msra.mxu0 0.0
      %624 = vmatpush.msra.mxu0 0.0
      %625 = vmatpush.msra.mxu0 0.0
      %626 = vmatpush.msra.mxu0 0.0
      %627 = vmatpush.msra.mxu0 0.0
      %628 = vmatpush.msra.mxu0 0.0
      %629 = vmatpush.msra.mxu0 0.0
      %630 = vmatpush.msra.mxu0 0.0
      %631 = vmatpush.msra.mxu0 0.0
      %632 = vmatpush.msra.mxu0 0.0
      %633 = vmatpush.msra.mxu0 0.0
      %634 = vmatpush.msra.mxu0 0.0
      %635 = vmatpush.msra.mxu0 %v618
      %636 = vmatpush.msra.mxu0 %v617
      %637 = vmatmul.f32.gmra.mxu0 %v445
      %v638 = vpop.f32.mrf.mxu0
      %v639 = vadd.f32 0.0, %v638
      %640 = vmatmul.f32.gmra.mxu0 %v447
      %v641 = vpop.f32.mrf.mxu0
      %v642 = vadd.f32 0.0, %v641
      %643 = vmatmul.f32.gmra.mxu0 %v449
      %v644 = vpop.f32.mrf.mxu0
      %v645 = vadd.f32 0.0, %v644
      %646 = vmatmul.f32.gmra.mxu0 %v451
      %v647 = vpop.f32.mrf.mxu0
      %v648 = vadd.f32 0.0, %v647
      %649 = vmatmul.f32.gmra.mxu0 %v453
      %v650 = vpop.f32.mrf.mxu0
      %v651 = vadd.f32 0.0, %v650
      %652 = vmatmul.f32.gmra.mxu0 %v455
      %v653 = vpop.f32.mrf.mxu0
      %v654 = vadd.f32 0.0, %v653
      %655 = vmatmul.f32.gmra.mxu0 %v457
      %v656 = vpop.f32.mrf.mxu0
      %v657 = vadd.f32 0.0, %v656
      %658 = vmatmul.f32.gmra.mxu0 %v619
      %v659 = vpop.f32.mrf.mxu0
      %v660 = vadd.f32 0.0, %v659
      %661 = vdwg.mxu0
      %v662 = vadd.f32 %v604, %v639
      %v663 = vadd.f32 %v605, %v642
      %v664 = vadd.f32 %v606, %v645
      %v665 = vadd.f32 %v607, %v648
      %v666 = vadd.f32 %v608, %v651
      %v667 = vadd.f32 %v609, %v654
      %v668 = vadd.f32 %v610, %v657
      %v669 = vadd.f32 %v611, %v660
      %670 = vst [vmem:[%s315] sm:$0xff] %v662
      %671 = vst [vmem:[%s315 + $0x8] sm:$0xff] %v663
      %672 = vst [vmem:[%s315 + $0x10] sm:$0xff] %v664
      %673 = vst [vmem:[%s315 + $0x18] sm:$0xff] %v665
      %674 = vst [vmem:[%s315 + $0x20] sm:$0xff] %v666
      %675 = vst [vmem:[%s315 + $0x28] sm:$0xff] %v667
      %676 = vst [vmem:[%s315 + $0x30] sm:$0xff] %v668
      %677 = vst [vmem:[%s315 + $0x38] sm:$0xff] %v669
      %v678 = vadd.f32 %v662, %v663
      %v679 = vadd.f32 %v678, %v664
      %v680 = vadd.f32 %v679, %v665
      %v681 = vadd.f32 %v680, %v666
      %v682 = vadd.f32 %v681, %v667
      %v683 = vadd.f32 %v682, %v668
      %v684 = vadd.f32 %v683, %v669
      %v685 = vrot.slane %v684, 4
      %v686 = vadd.f32 %v684, %v685
      %v687 = vrot.slane %v686, 2
      %v688 = vadd.f32 %v686, %v687
      %v689 = vrot.slane %v688, 1
      %v690 = vadd.f32 %v688, %v689
      %v691 = vmul.f32 %v690, 0.015625
      %v692 = vsub.f32 %v662, %v691
      %v693 = vsub.f32 %v663, %v691
      %v694 = vsub.f32 %v664, %v691
      %v695 = vsub.f32 %v665, %v691
      %v696 = vsub.f32 %v666, %v691
      %v697 = vsub.f32 %v667, %v691
      %v698 = vsub.f32 %v668, %v691
      %v699 = vsub.f32 %v669, %v691
      %v700 = vmul.f32 %v692, %v692
      %v701 = vmul.f32 %v693, %v693
      %v702 = vmul.f32 %v694, %v694
      %v703 = vmul.f32 %v695, %v695
      %v704 = vmul.f32 %v696, %v696
      %v705 = vmul.f32 %v697, %v697
      %v706 = vmul.f32 %v698, %v698
      %v707 = vmul.f32 %v699, %v699
      %v708 = vadd.f32 %v700, %v701
      %v709 = vadd.f32 %v708, %v702
      %v710 = vadd.f32 %v709, %v703
      %v711 = vadd.f32 %v710, %v704
      %v712 = vadd.f32 %v711, %v705
      %v713 = vadd.f32 %v712, %v706
      %v714 = vadd.f32 %v713, %v707
      %v715 = vrot.slane %v714, 4
      %v716 = vadd.f32 %v714, %v715
      %v717 = vrot.slane %v716, 2
      %v718 = vadd.f32 %v716, %v717
      %v719 = vrot.slane %v718, 1
      %v720 = vadd.f32 %v718, %v719
      %vm721 = vcmask 1040384
      %v722 = vsel %vm721, %v690, %v720
      %723 = vst [vmem:[%s322] sm:$0x3] %v722
      %s724 = sadd.s32 %s20, %s21
      %s725 = smul.u32 8, %s724
      %p726 = scmp.lt.s32.totalorder %s725, 15
      %s727 = scalar_select %p726, %s725, 15
      %s728 = smul.addr %s727, 8
      %s729 = scalar_lea.vmem %s3, %s728
      %s730 = sadd.s32 %s20, %s21
      %p731 = scmp.lt.s32.totalorder %s730, 1
      %s732 = scalar_select %p731, %s730, 1
      %s733 = smul.addr %s732, 2
      %s734 = scalar_lea.vmem %s4, %s733
      // Predicated region
      $region33: #{conv_block.2} parent=31 // pred_check
        %p735 = pneg %p129
      $region34: #{conv_block.2} parent=31 // pred_check_branch
        %737 = sbr.rel (%p735) target = $region36
      $region35: #{conv_block.2} parent=31 // pred_region
        %s738 = sadd.s32 %s20, %s21
        %s739 = smul.u32 8, %s738
      $region36: #{conv_block.2} parent=31 // pred_fallthru
        _
      // Predicated region
      $region37: #{conv_block.2} parent=31 // pred_check
        %p740 = pneg %p157
      $region38: #{conv_block.2} parent=31 // pred_check_branch
        %742 = sbr.rel (%p740) target = $region40
      $region39: #{conv_block.2} parent=31 // pred_region
        %s743 = sadd.s32 %s20, %s21
      $region40: #{conv_block.2} parent=31 // pred_fallthru
        _
    $region32: #{conv_block.2} parent=5 // pred_fallthru
      _
    %p744 = scmp.le.s32.totalorder 2, %s11
    // Predicated region
    $region41: #{conv_block.2} parent=5 // pred_check
      %p745 = pneg %p744
    $region42: #{conv_block.2} parent=5 // pred_check_branch
      %747 = sbr.rel (%p745) target = $region44
    $region43: #{conv_block.2} parent=5 // pred_region
      %s748 = ssub.s32 %s11, 2
      // Predicated region
      $region45: #{conv_block.2} parent=43 // pred_check
        %p749 = pneg %p135
      $region46: #{conv_block.2} parent=43 // pred_check_branch
        %751 = sbr.rel (%p749) target = $region48
      $region47: #{conv_block.2} parent=43 // pred_region
        %s752 = sadd.s32 %s22, %s23
        %s753 = smul.u32 8, %s752
        %p754 = scmp.lt.s32.totalorder %s753, 15
        %s755 = scalar_select %p754, %s753, 15
        %s756 = smul.addr %s755, 8
        %s757 = scalar_lea.vmem %s3, %s756
      $region48: #{conv_block.2} parent=43 // pred_fallthru
        _
      // Predicated region
      $region49: #{conv_block.2} parent=43 // pred_check
        %p758 = pneg %p163
      $region50: #{conv_block.2} parent=43 // pred_check_branch
        %760 = sbr.rel (%p758) target = $region52
      $region51: #{conv_block.2} parent=43 // pred_region
        %s761 = sadd.s32 %s22, %s23
        %p762 = scmp.lt.s32.totalorder %s761, 1
        %s763 = scalar_select %p762, %s761, 1
        %s764 = smul.addr %s763, 2
        %s765 = scalar_lea.vmem %s4, %s764
      $region52: #{conv_block.2} parent=43 // pred_fallthru
        _
    $region44: #{conv_block.2} parent=5 // pred_fallthru
      _
  $region6: #{conv_block.2} parent=0 // loop_footer
    %s15 = sadd.s32 1, %s11
  $region7: #{conv_block.2} parent=0 // loop_footer_branch
    %10 = sbr.rel target = $region3
  $region8: #{conv_block.2} parent=0 // loop_exit
    _

</llo_original>
